<compile_context>
chip_gen: v6e
topology: v6e:2x2x1
jax: 0.10.0
libtpu: 0.0.40
codegen_flags: <defaults>
</compile_context>

<pallas_src>
import functools

import jax
import jax.numpy as jnp
import numpy as np
from jax import lax
from jax.experimental import pallas as pl
from jax.experimental.pallas import tpu as pltpu

BIG_NEG = 1e12  # torch code uses -1000000000000.0


def _round_up(x, m):
    return (x + m - 1) // m * m


def _choose_tile(L, heads, cap=512):
    """Square tile T (multiple of 128) and padded length Lp = k*T >= L.

    Cost model: padded-plane area (the kernel is store-bound) plus the fixed ~0.35us
    per-grid-step overhead expressed in element-equivalents, so awkward L (513, 640, ...)
    picks a smaller tile instead of padding all the way to the next multiple of `cap`.
    """
    cap = max(128, (cap // 128) * 128)
    # keep the double-buffered output block (2 * heads * T * T * 4 B) under ~16 MiB
    while cap > 128 and 2 * heads * cap * cap * 4 > 16 * 1024 * 1024:
        cap -= 128
    best = None
    for T in range(cap, 0, -128):
        Lp = _round_up(L, T)
        cost = Lp * Lp + (Lp // T) ** 2 * 22_000
        if best is None or cost < best[0]:
            best = (cost, T, Lp)
    return best[1], best[2]


# --------------------------------------------------------------------------------------
# Pre-pass: dense projection + RoPE, done ONCE per row (hoisted out of the L x L sweep).
# --------------------------------------------------------------------------------------
def _project_rope_kernel(x_ref, w_ref, b_ref, rope_ref, out_ref, *, F):
    # x_ref:    (1, Tr, hidden)
    # w_ref:    (hidden, 2F)    [ W | W with pair-swapped columns ]
    # b_ref:    (1, 2F)
    # rope_ref: (2, Tr, F)      [0] = cos table, [1] = sign-folded sin table
    # out_ref:  (1, Tr, F)      roped projection, interleaved [q0,k0,q1,k1,...]
    both = jnp.dot(x_ref[0], w_ref[...],
                   preferred_element_type=jnp.float32) + b_ref[...]        # (Tr, 2F)
    # rope(v) = v*cos + (+/- v[d^1])*sin ; the pair-swapped copy comes from the second
    # half of the same MXU matmul, the RoPE sign is folded into rope_ref[1].
    roped = both[:, :F] * rope_ref[0] + both[:, F:] * rope_ref[1]
    out_ref[0] = roped.astype(out_ref.dtype)


# --------------------------------------------------------------------------------------
# Main kernel: per (batch, q-tile, k-tile) write all heads' (T, T) logit planes.
# --------------------------------------------------------------------------------------
def _logits_kernel(qs_ref, ks_ref, mq_ref, mk_ref, out_ref, *, heads, head_size, t):
    # qs_ref: (1, T, F)  roped slab rows of the q tile
    # ks_ref: (1, T, F)  roped slab rows of the k tile
    # mq_ref: (1, T, 1)  mask[b, i]
    # mk_ref: (1, 1, T)  mask[b, j]
    # out_ref:(1, heads, T, T)
    inv = 1.0 / float(head_size) ** 0.5
    neg = -BIG_NEG * inv

    q_slab = qs_ref[0]                                               # (T, F)
    k_slab = ks_ref[0]                                               # (T, F)

    # Mask epilogue: scale = pair/sqrt(dh); penalty is EXACTLY 0 on kept entries so the
    # huge sentinel never cancels against the O(1) logits.
    pair = mq_ref[0] * mk_ref[0]                                     # (T, T)
    scale = pair * inv
    row = pl.program_id(1) * t + lax.broadcasted_iota(jnp.int32, (t, 1), 0)
    col = pl.program_id(2) * t + lax.broadcasted_iota(jnp.int32, (1, t), 1)
    penalty = neg * (1.0 - pair) + jnp.where(row > col, neg, 0.0)    # (T, T)

    dim_nums = (((1,), (1,)), ((), ()))   # logit[i, j] = q_i . k_j  (contract head dim)
    for h in range(heads):                # static unroll (heads=4)
        base = 2 * h * head_size
        q_h = q_slab[:, base:base + head_size]                       # (T, Dh)
        k_h = k_slab[:, base + head_size:base + 2 * head_size]       # (T, Dh)
        logit = lax.dot_general(q_h, k_h, dim_nums,
                                preferred_element_type=jnp.float32)  # (T, T)
        out_ref[0, h] = (logit * scale + penalty).astype(out_ref.dtype)


def global_pointer(x, mask, W, b, *, heads, head_size, tile_cap=512):
    """Pallas GlobalPointer forward.  x: (B, L, hidden) f32, mask: (B, L) in {0,1}."""
    B, L, hidden = x.shape
    F = heads * head_size * 2
    assert head_size % 2 == 0, "RoPE pair-swap requires an even head_size"
    assert W.shape == (hidden, F)

    T, Lp = _choose_tile(L, heads, tile_cap)
    n = Lp // T

    # ---- pad to the tiled length (fixes the old full-axis fallback for awkward L) -----
    if Lp != L:
        x = jnp.pad(x, ((0, 0), (0, Lp - L), (0, 0)))
        mask = jnp.pad(mask, ((0, 0), (0, Lp - L)))

    # ---- host-side constants (data independent) ---------------------------------------
    dh = head_size
    pos = jnp.arange(Lp, dtype=jnp.float32)
    theta = jnp.power(10000.0, -2.0 * jnp.arange(dh // 2, dtype=jnp.float32) / dh)
    ang = pos[:, None] * theta[None, :]                        # (Lp, dh/2)
    # torch's `.repeat(...,2)` tiling, broadcast to every 16-lane q/k segment.
    cos_full = jnp.tile(jnp.cos(ang), (1, 4 * heads))          # (Lp, F)
    sin_full = jnp.tile(jnp.sin(ang), (1, 4 * heads))          # (Lp, F)
    sign = jnp.where(jnp.arange(F) % 2 == 0, -1.0, 1.0).astype(jnp.float32)
    rope_tab = jnp.stack([cos_full, sin_full * sign[None, :]], axis=0)   # (2, Lp, F)

    # Fold the RoPE pair-swap (v2[d] = +/- v[d^1]) into the dense layer: the second half
    # of W2 produces proj[d^1] from the same MXU matmul; the sign lives in rope_tab[1].
    perm = jnp.arange(F) ^ 1
    W2 = jnp.concatenate([W, W[:, perm]], axis=1)              # (hidden, 2F)
    b2 = jnp.concatenate([b, b[perm]])[None, :]                # (1, 2F)

    m = mask.astype(x.dtype)
    mask_q = m[:, :, None]                                     # (B, Lp, 1)
    mask_k = m[:, None, :]                                     # (B, 1, Lp)

    # ---- pre-pass: roped projection slab (B, Lp, F), computed once per row ------------
    pre = pl.pallas_call(
        functools.partial(_project_rope_kernel, F=F),
        out_shape=jax.ShapeDtypeStruct((B, Lp, F), jnp.float32),
        grid_spec=pltpu.PrefetchScalarGridSpec(
            num_scalar_prefetch=0,
            grid=(B, n),
            in_specs=[
                pl.BlockSpec((1, T, hidden), lambda bb, r: (bb, r, 0)),   # x rows
                pl.BlockSpec((hidden, 2 * F), lambda bb, r: (0, 0)),      # [W | W swapped]
                pl.BlockSpec((1, 2 * F), lambda bb, r: (0, 0)),           # [b | b swapped]
                pl.BlockSpec((2, T, F), lambda bb, r: (0, r, 0)),         # rope tables
            ],
            out_specs=pl.BlockSpec((1, T, F), lambda bb, r: (bb, r, 0)),
        ),
        compiler_params=pltpu.CompilerParams(
            dimension_semantics=("parallel", "parallel")),
    )(x, W2, b2, rope_tab)

    # ---- main L x L sweep: store-bound on the (1, heads, T, T) output block -----------
    kernel = functools.partial(_logits_kernel, heads=heads, head_size=head_size, t=T)
    out = pl.pallas_call(
        kernel,
        out_shape=jax.ShapeDtypeStruct((B, heads, Lp, Lp), x.dtype),
        grid_spec=pltpu.PrefetchScalarGridSpec(
            num_scalar_prefetch=0,
            grid=(B, n, n),
            in_specs=[
                pl.BlockSpec((1, T, F), lambda bb, i, j: (bb, i, 0)),   # slab (q rows)
                pl.BlockSpec((1, T, F), lambda bb, i, j: (bb, j, 0)),   # slab (k rows)
                pl.BlockSpec((1, T, 1), lambda bb, i, j: (bb, i, 0)),   # mask (q rows)
                pl.BlockSpec((1, 1, T), lambda bb, i, j: (bb, 0, j)),   # mask (k rows)
            ],
            out_specs=pl.BlockSpec((1, heads, T, T), lambda bb, i, j: (bb, 0, i, j)),
        ),
        compiler_params=pltpu.CompilerParams(
            dimension_semantics=("parallel", "parallel", "parallel"),
            vmem_limit_bytes=40 * 1024 * 1024),
    )(pre, pre, mask_q, mask_k)

    if Lp != L:
        out = out[:, :, :L, :L]
    return out


def global_pointer_ref(x, mask, W, b, *, heads, head_size):
    """Pure-JAX reference mirroring the torch code exactly."""
    B, L, hidden = x.shape
    proj = jnp.dot(x, W, precision=lax.Precision.HIGHEST) + b
    proj = proj.reshape(B, L, heads, 2 * head_size)
    qw, kw = proj[..., :head_size], proj[..., head_size:]

    pos_ids = jnp.arange(L, dtype=jnp.float32)
    theta = jnp.power(10000.0,
                      -2.0 * jnp.arange(head_size // 2, dtype=jnp.float32) / head_size)
    ang = pos_ids[:, None] * theta[None, :]
    emb = jnp.stack([jnp.sin(ang), jnp.cos(ang)], axis=-1).reshape(L, head_size)
    cos_pos = jnp.tile(emb[None, :, None, 1::2], (1, 1, 1, 2))
    sin_pos = jnp.tile(emb[None, :, None, ::2], (1, 1, 1, 2))

    def rot(v):
        v2 = jnp.stack([-v[..., 1::2], v[..., ::2]], axis=-1).reshape(v.shape)
        return v * cos_pos + v2 * sin_pos

    qw = rot(qw)
    kw = rot(kw)
    logit = jnp.einsum('bihd,bjhd->bhij', qw, kw, precision=lax.Precision.HIGHEST)

    m = mask.astype(x.dtype)
    pm = m[:, None, :, None] * m[:, None, None, :]
    logit = logit * pm + (-BIG_NEG) * (1.0 - pm)
    tril = jnp.tril(jnp.ones((L, L), x.dtype), k=-1)
    logit = logit - tril * BIG_NEG
    return logit / (head_size ** 0.5)


if __name__ == "__main__":
    heads, head_size, hidden = 4, 16, 32

    key = jax.random.PRNGKey(0)
    kx, kw_, kb, kx2 = jax.random.split(key, 4)

    # deterministic synthetic params for nn.Linear(hidden, heads*head_size*2)
    W = 0.02 * jax.random.normal(kw_, (hidden, heads * head_size * 2), dtype=jnp.float32)
    b = 0.02 * jax.random.normal(kb, (heads * head_size * 2,), dtype=jnp.float32)

    # ---- small shape consistent with the module: B=2, L=8, hidden=32 ------------------
    B, L = 2, 8
    x = jax.random.normal(kx, (B, L, hidden), dtype=jnp.float32)
    lengths = jnp.array([L, 5])   # batch 0 fully valid, batch 1 valid for first 5 tokens
    mask = (jnp.arange(L)[None, :] < lengths[:, None]).astype(jnp.float32)

    out = global_pointer(x, mask, W, b, heads=heads, head_size=head_size)
    out = jax.block_until_ready(out)
    ref = global_pointer_ref(x, mask, W, b, heads=heads, head_size=head_size)
    np.testing.assert_allclose(np.asarray(out), np.asarray(ref), rtol=1e-4, atol=1e-3)

    # ---- larger, non-tile-multiple L: exercises tiling, padding, tril tile offsets ----
    B2, L2 = 1, 640
    x2 = jax.random.normal(kx2, (B2, L2, hidden), dtype=jnp.float32)
    mask2 = (jnp.arange(L2)[None, :] < jnp.array([500])[:, None]).astype(jnp.float32)
    out2 = jax.block_until_ready(
        global_pointer(x2, mask2, W, b, heads=heads, head_size=head_size))
    ref2 = global_pointer_ref(x2, mask2, W, b, heads=heads, head_size=head_size)
    np.testing.assert_allclose(np.asarray(out2), np.asarray(ref2), rtol=1e-4, atol=1e-3)

    print("KERNEL_OK")
</pallas_src>

<mosaic_0001>
module attributes {stable_mosaic.version = 11 : i64} {
  func.func @_project_rope_kernel(%arg0: i32, %arg1: i32, %arg2: memref<1x128x32xf32, #tpu.memory_space<vmem>>, %arg3: memref<32x256xf32, #tpu.memory_space<vmem>>, %arg4: memref<1x256xf32, #tpu.memory_space<vmem>>, %arg5: memref<2x128x128xf32, #tpu.memory_space<vmem>>, %arg6: memref<1x128x128xf32, #tpu.memory_space<vmem>>) attributes {dimension_semantics = [#tpu.dimension_semantics<parallel>, #tpu.dimension_semantics<parallel>], iteration_bounds = array<i64: 2, 1>, scalar_prefetch = 0 : i64, scratch_operands = 0 : i64, tpu.core_type = #tpu.core_type<tc>, window_params = [{transform_indices = @transform_0, window_bounds = array<i64: 1, 128, 32>}, {pipeline_mode = #tpu.pipeline_mode<synchronous>, transform_indices = @transform_1, window_bounds = array<i64: 32, 256>}, {pipeline_mode = #tpu.pipeline_mode<synchronous>, transform_indices = @transform_2, window_bounds = array<i64: 1, 256>}, {transform_indices = @transform_3, window_bounds = array<i64: 2, 128, 128>}, {transform_indices = @transform_4, window_bounds = array<i64: 1, 128, 128>}]} {
    %c0 = arith.constant 0 : index
    %c0_0 = arith.constant 0 : index
    %c0_1 = arith.constant 0 : index
    %0 = vector.load %arg2[%c0, %c0_0, %c0_1] : memref<1x128x32xf32, #tpu.memory_space<vmem>>, vector<1x128x32xf32>
    %1 = vector.shape_cast %0 : vector<1x128x32xf32> to vector<128x32xf32>
    %c0_2 = arith.constant 0 : index
    %c0_3 = arith.constant 0 : index
    %2 = vector.load %arg3[%c0_2, %c0_3] : memref<32x256xf32, #tpu.memory_space<vmem>>, vector<32x256xf32>
    %cst = arith.constant dense<0.000000e+00> : vector<128x256xf32>
    %3 = tpu.matmul %1, %2, %cst {dimension_numbers = #tpu.dot_dimension_numbers<[1], [0], [0], [1], [0, 0, 1, 1], [], []>} : vector<128x32xf32>, vector<32x256xf32>, vector<128x256xf32> -> vector<128x256xf32>
    %c0_4 = arith.constant 0 : index
    %c0_5 = arith.constant 0 : index
    %4 = vector.load %arg4[%c0_4, %c0_5] : memref<1x256xf32, #tpu.memory_space<vmem>>, vector<1x256xf32>
    %5 = vector.broadcast %4 : vector<1x256xf32> to vector<128x256xf32>
    %6 = arith.addf %3, %5 : vector<128x256xf32>
    %7 = vector.extract_strided_slice %6 {offsets = [0, 0], sizes = [128, 128], strides = [1, 1]} : vector<128x256xf32> to vector<128x128xf32>
    %c0_6 = arith.constant 0 : index
    %c0_7 = arith.constant 0 : index
    %c0_8 = arith.constant 0 : index
    %8 = vector.load %arg5[%c0_6, %c0_7, %c0_8] : memref<2x128x128xf32, #tpu.memory_space<vmem>>, vector<1x128x128xf32>
    %9 = vector.shape_cast %8 : vector<1x128x128xf32> to vector<128x128xf32>
    %10 = arith.mulf %7, %9 : vector<128x128xf32>
    %11 = vector.extract_strided_slice %6 {offsets = [0, 128], sizes = [128, 128], strides = [1, 1]} : vector<128x256xf32> to vector<128x128xf32>
    %c1 = arith.constant 1 : index
    %c0_9 = arith.constant 0 : index
    %c0_10 = arith.constant 0 : index
    %12 = vector.load %arg5[%c1, %c0_9, %c0_10] : memref<2x128x128xf32, #tpu.memory_space<vmem>>, vector<1x128x128xf32>
    %13 = vector.shape_cast %12 : vector<1x128x128xf32> to vector<128x128xf32>
    %14 = arith.mulf %11, %13 : vector<128x128xf32>
    %15 = arith.addf %10, %14 : vector<128x128xf32>
    %c0_11 = arith.constant 0 : index
    %c0_12 = arith.constant 0 : index
    %c0_13 = arith.constant 0 : index
    %16 = vector.load %arg6[%c0_11, %c0_12, %c0_13] : memref<1x128x128xf32, #tpu.memory_space<vmem>>, vector<1x128x128xf32>
    %17 = vector.shape_cast %16 : vector<1x128x128xf32> to vector<128x128xf32>
    %18 = vector.shape_cast %15 : vector<128x128xf32> to vector<1x128x128xf32>
    tpu.vector_store %arg6[%c0_11, %c0_12, %c0_13], %18 {strides = array<i32>} : memref<1x128x128xf32, #tpu.memory_space<vmem>>, vector<1x128x128xf32>,
    return
  }
  func.func @transform_0(%arg0: i32, %arg1: i32) -> (i32, i32, i32) {
    %c0_i32 = arith.constant 0 : i32
    %c0_i32_0 = arith.constant 0 : i32
    return %arg0, %arg1, %c0_i32 : i32, i32, i32
  }
  func.func @transform_1(%arg0: i32, %arg1: i32) -> (i32, i32) {
    %c0_i32 = arith.constant 0 : i32
    %c0_i32_0 = arith.constant 0 : i32
    %c0_i32_1 = arith.constant 0 : i32
    return %c0_i32, %c0_i32_0 : i32, i32
  }
  func.func @transform_2(%arg0: i32, %arg1: i32) -> (i32, i32) {
    %c0_i32 = arith.constant 0 : i32
    %c0_i32_0 = arith.constant 0 : i32
    %c0_i32_1 = arith.constant 0 : i32
    return %c0_i32, %c0_i32_0 : i32, i32
  }
  func.func @transform_3(%arg0: i32, %arg1: i32) -> (i32, i32, i32) {
    %c0_i32 = arith.constant 0 : i32
    %c0_i32_0 = arith.constant 0 : i32
    %c0_i32_1 = arith.constant 0 : i32
    return %c0_i32, %arg1, %c0_i32_0 : i32, i32, i32
  }
  func.func @transform_4(%arg0: i32, %arg1: i32) -> (i32, i32, i32) {
    %c0_i32 = arith.constant 0 : i32
    %c0_i32_0 = arith.constant 0 : i32
    return %arg0, %arg1, %c0_i32 : i32, i32, i32
  }
}

</mosaic_0001>

<llo_original>
// kernel: tpu_custom_call.1
$region0: #{tpu_custom_call.1}
  #allocation0 [shape = 'u32[]', space=smem, size = 0x4, offset = 0x4, fixed_abs, tag = 'smem constant byte address 0x4 - core index']
  #allocation1 [shape = 'u32[144,128]{1,0:T(1,128)}', space=vmem, size = 0x12000, scoped, tag = 'internal scratch']
  %s0 = inlined_call_operand.vmem [shape: f32[2,128,32], index: 0, kind: input, shape index: {}]
  %s1 = inlined_call_operand.vmem [shape: f32[32,256], index: 1, kind: input, shape index: {}]
  %s2 = inlined_call_operand.vmem [shape: f32[1,256], index: 2, kind: input, shape index: {}]
  %s3 = inlined_call_operand.vmem [shape: f32[2,128,128], index: 3, kind: input, shape index: {}]
  %s4 = inlined_call_operand.hbm [shape: f32[2,128,128], index: 4, kind: output, shape index: {}]
  %s5 = sld [smem:[#allocation0]]
  $region49: #{tpu_custom_call.1} parent=0
    _
  %s7 = ssub.s32 1, %s5
  %s8 = scalar_select 0, %s7, %s5
  $region1: #{tpu_custom_call.1} parent=0
    #allocation2 [shape = 'u8[131072]{0}', space=vmem, size = 0x20000, scoped, tag = 'output window, operand 0']
    #allocation3 [shape = 's32[2]{0}', space=sflag, size = 0x8, scoped, tag = 'scoped memory for tpu_custom_call.1']
    %9 = vsyncpa [#allocation3], 0
    %s10 = scalar_lea.sflag [#allocation3], 1
    %11 = vsyncpa %s10, 0
    loop: start=0, step=1, limit=4
    $region2: #{tpu_custom_call.1} parent=1 // loop_pre_header
      _
    $region3: #{tpu_custom_call.1} parent=1 // loop_header
      %s13 = sphi 0, %s17
      %p14 = scmp.ge.s32.totalorder %s13, 4
      %s20 = sphi 0, %s32
      %s21 = sphi 0, %s28
      %s22 = sphi 0, %s20
      %s23 = sphi 0, %s21
      %s24 = sphi 0, %s22
      %s25 = sphi 0, %s23
      %s37 = sphi 0, %s39
      %s40 = sphi 0, %s37
      %s41 = sphi 0, %s40
      %s57 = sphi 0, %s41
      %s61 = sphi 0, %s61
      %s63 = sphi 0, %s61
      %s64 = sphi 0, %s63
      %s78 = sphi 0, %s64
      %s82 = sphi 0, %s82
      %s84 = sphi 0, %s82
      %s85 = sphi 0, %s84
      %s99 = sphi 0, %s85
      %s105 = sphi 0, %s107
      %s108 = sphi 0, %s105
      %s109 = sphi 0, %s108
      %s125 = sphi 0, %s109
      %s133 = sphi 0, %s135
      %s136 = sphi 0, %s133
      %s137 = sphi 0, %s136
      %s153 = sphi 0, %s137
    $region4: #{tpu_custom_call.1} parent=1 // loop_header_branch
      %16 = sbr.rel (%p14) target = $region8
    $region5: #{tpu_custom_call.1} parent=1 // loop_body
      %s18 = ssub.s32 %s13, 1
      %s19 = ssub.s32 %s13, 2
      %s26 = sadd.s32 1, %s21
      %p27 = scmp.ge.s32.totalorder %s26, 1
      %s28 = scalar_select %p27, 0, %s26
      %s29 = sadd.s32 1, %s20
      %s30 = scalar_select %p27, %s29, %s20
      %p31 = scmp.ge.s32.totalorder %s30, 2
      %s32 = scalar_select %p31, 0, %s30
      %s33 = ssub.s32 %s20, %s32
      %s34 = ssub.s32 %s21, %s28
      %s35 = sor.u32 %s33, %s34
      %p36 = scmp.eq.s32.totalorder %s35, 0
      %s38 = sadd.s32 %s37, 1
      %s39 = scalar_select %p36, %s37, %s38
      %p42 = pneg %p36
      %p43 = scmp.eq.s32.totalorder %s13, 1
      %p44 = por %p42, %p43
      %p45 = scmp.ne.s32.totalorder %s37, %s40
      %p46 = scmp.eq.s32.totalorder %s13, 0
      %p47 = por %p45, %p46
      %p48 = scmp.ne.s32.totalorder %s37, %s40
      %p49 = scmp.eq.s32.totalorder %s18, 1
      %p50 = por %p48, %p49
      %p51 = scmp.ne.s32.totalorder %s40, %s41
      %p52 = scmp.eq.s32.totalorder %s18, 0
      %p53 = por %p51, %p52
      %p54 = scmp.ne.s32.totalorder %s40, %s41
      %p55 = scmp.eq.s32.totalorder %s19, 1
      %p56 = por %p54, %p55
      %p58 = scmp.ne.s32.totalorder %s41, %s57
      %p59 = scmp.eq.s32.totalorder %s19, 0
      %p60 = por %p58, %p59
      %s62 = sadd.s32 %s61, 1
      %p65 = scmp.eq.s32.totalorder %s13, 1
      %p66 = scmp.ne.s32.totalorder %s61, %s63
      %p67 = scmp.eq.s32.totalorder %s13, 0
      %p68 = por %p66, %p67
      %p69 = scmp.ne.s32.totalorder %s61, %s63
      %p70 = scmp.eq.s32.totalorder %s18, 1
      %p71 = por %p69, %p70
      %p72 = scmp.ne.s32.totalorder %s63, %s64
      %p73 = scmp.eq.s32.totalorder %s18, 0
      %p74 = por %p72, %p73
      %p75 = scmp.ne.s32.totalorder %s63, %s64
      %p76 = scmp.eq.s32.totalorder %s19, 1
      %p77 = por %p75, %p76
      %p79 = scmp.ne.s32.totalorder %s64, %s78
      %p80 = scmp.eq.s32.totalorder %s19, 0
      %p81 = por %p79, %p80
      %s83 = sadd.s32 %s82, 1
      %p86 = scmp.eq.s32.totalorder %s13, 1
      %p87 = scmp.ne.s32.totalorder %s82, %s84
      %p88 = scmp.eq.s32.totalorder %s13, 0
      %p89 = por %p87, %p88
      %p90 = scmp.ne.s32.totalorder %s82, %s84
      %p91 = scmp.eq.s32.totalorder %s18, 1
      %p92 = por %p90, %p91
      %p93 = scmp.ne.s32.totalorder %s84, %s85
      %p94 = scmp.eq.s32.totalorder %s18, 0
      %p95 = por %p93, %p94
      %p96 = scmp.ne.s32.totalorder %s84, %s85
      %p97 = scmp.eq.s32.totalorder %s19, 1
      %p98 = por %p96, %p97
      %p100 = scmp.ne.s32.totalorder %s85, %s99
      %p101 = scmp.eq.s32.totalorder %s19, 0
      %p102 = por %p100, %p101
      %s103 = ssub.s32 %s21, %s28
      %p104 = scmp.eq.s32.totalorder %s103, 0
      %s106 = sadd.s32 %s105, 1
      %s107 = scalar_select %p104, %s105, %s106
      %p110 = pneg %p104
      %p111 = scmp.eq.s32.totalorder %s13, 1
      %p112 = por %p110, %p111
      %p113 = scmp.ne.s32.totalorder %s105, %s108
      %p114 = scmp.eq.s32.totalorder %s13, 0
      %p115 = por %p113, %p114
      %p116 = scmp.ne.s32.totalorder %s105, %s108
      %p117 = scmp.eq.s32.totalorder %s18, 1
      %p118 = por %p116, %p117
      %p119 = scmp.ne.s32.totalorder %s108, %s109
      %p120 = scmp.eq.s32.totalorder %s18, 0
      %p121 = por %p119, %p120
      %p122 = scmp.ne.s32.totalorder %s108, %s109
      %p123 = scmp.eq.s32.totalorder %s19, 1
      %p124 = por %p122, %p123
      %p126 = scmp.ne.s32.totalorder %s109, %s125
      %p127 = scmp.eq.s32.totalorder %s19, 0
      %p128 = por %p126, %p127
      %s129 = ssub.s32 %s20, %s32
      %s130 = ssub.s32 %s21, %s28
      %s131 = sor.u32 %s129, %s130
      %p132 = scmp.eq.s32.totalorder %s131, 0
      %s134 = sadd.s32 %s133, 1
      %s135 = scalar_select %p132, %s133, %s134
      %p138 = pneg %p132
      %p139 = scmp.eq.s32.totalorder %s13, 1
      %p140 = por %p138, %p139
      %p141 = scmp.ne.s32.totalorder %s133, %s136
      %p142 = scmp.eq.s32.totalorder %s13, 0
      %p143 = por %p141, %p142
      %p144 = scmp.ne.s32.totalorder %s133, %s136
      %p145 = scmp.eq.s32.totalorder %s18, 1
      %p146 = por %p144, %p145
      %p147 = scmp.ne.s32.totalorder %s136, %s137
      %p148 = scmp.eq.s32.totalorder %s18, 0
      %p149 = por %p147, %p148
      %p150 = scmp.ne.s32.totalorder %s136, %s137
      %p151 = scmp.eq.s32.totalorder %s19, 1
      %p152 = por %p150, %p151
      %p154 = scmp.ne.s32.totalorder %s137, %s153
      %p155 = scmp.eq.s32.totalorder %s19, 0
      %p156 = por %p154, %p155
      %p157 = scmp.le.s32.totalorder 1, %s13
      %p158 = scmp.lt.s32.totalorder %s13, 3
      %p159 = pnand %p157, %p158
      %p160 = pneg %p159
      // Predicated region
      $region9: #{tpu_custom_call.1} parent=5 // pred_check
        _
      $region10: #{tpu_custom_call.1} parent=5 // pred_check_branch
        %162 = sbr.rel (%p159) target = $region12
      $region11: #{tpu_custom_call.1} parent=5 // pred_region
        %s163 = ssub.s32 %s13, 1
        // Predicated region
        $region13: #{tpu_custom_call.1} parent=11 // pred_check
          %p164 = pneg %p74
        $region14: #{tpu_custom_call.1} parent=11 // pred_check_branch
          %166 = sbr.rel (%p164) target = $region16
        $region15: #{tpu_custom_call.1} parent=11 // pred_region
          _
        $region16: #{tpu_custom_call.1} parent=11 // pred_fallthru
          _
        // Predicated region
        $region17: #{tpu_custom_call.1} parent=11 // pred_check
          %p167 = pneg %p95
        $region18: #{tpu_custom_call.1} parent=11 // pred_check_branch
          %169 = sbr.rel (%p167) target = $region20
        $region19: #{tpu_custom_call.1} parent=11 // pred_region
          _
        $region20: #{tpu_custom_call.1} parent=11 // pred_fallthru
          _
        // Predicated region
        $region21: #{tpu_custom_call.1} parent=11 // pred_check
          %p170 = pneg %p121
        $region22: #{tpu_custom_call.1} parent=11 // pred_check_branch
          %172 = sbr.rel (%p170) target = $region24
        $region23: #{tpu_custom_call.1} parent=11 // pred_region
          %s173 = smul.u32 16, %s23
          %p174 = scmp.lt.s32.totalorder %s173, 15
          %s175 = scalar_select %p174, %s173, 15
          %s176 = smul.addr %s175, 8
          %s177 = scalar_lea.vmem %s3, %s176
          %s178 = smul.u32 16, %s23
        $region24: #{tpu_custom_call.1} parent=11 // pred_fallthru
          _
      $region12: #{tpu_custom_call.1} parent=5 // pred_fallthru
        _
      %p179 = scmp.lt.s32.totalorder %s13, 2
      // Predicated region
      $region25: #{tpu_custom_call.1} parent=5 // pred_check
        %p180 = pneg %p179
      $region26: #{tpu_custom_call.1} parent=5 // pred_check_branch
        %182 = sbr.rel (%p180) target = $region28
      $region27: #{tpu_custom_call.1} parent=5 // pred_region
        // Predicated region
        $region29: #{tpu_custom_call.1} parent=27 // pred_check
          %p183 = pneg %p47
        $region30: #{tpu_custom_call.1} parent=27 // pred_check_branch
          %185 = sbr.rel (%p183) target = $region32
        $region31: #{tpu_custom_call.1} parent=27 // pred_region
          %s186 = smul.u32 16, %s21
          %p187 = scmp.lt.s32.totalorder %s20, 1
          %s188 = scalar_select %p187, %s20, 1
          %p189 = scmp.lt.s32.totalorder %s186, 15
          %s190 = scalar_select %p189, %s186, 15
          %s191 = smul.addr %s188, 16
          %s192 = sadd.s32 %s190, %s191
          %s193 = smul.addr %s192, 8
          %s194 = scalar_lea.vmem %s0, %s193
          %s195 = smul.u32 16, %s21
        $region32: #{tpu_custom_call.1} parent=27 // pred_fallthru
          _
      $region28: #{tpu_custom_call.1} parent=5 // pred_fallthru
        _
      %p196 = scmp.le.s32.totalorder 1, %s13
      %p197 = scmp.lt.s32.totalorder %s13, 3
      %p198 = pnand %p196, %p197
      %p199 = pneg %p198
      // Predicated region
      $region33: #{tpu_custom_call.1} parent=5 // pred_check
        _
      $region34: #{tpu_custom_call.1} parent=5 // pred_check_branch
        %201 = sbr.rel (%p198) target = $region36
      $region35: #{tpu_custom_call.1} parent=5 // pred_region
        %s202 = ssub.s32 %s13, 1
        %s203 = smul.u32 16, %s23
        %p204 = scmp.lt.s32.totalorder %s22, 1
        %s205 = scalar_select %p204, %s22, 1
        %p206 = scmp.lt.s32.totalorder %s203, 15
        %s207 = scalar_select %p206, %s203, 15
        %s208 = smul.addr %s205, 16
        %s209 = sadd.s32 %s207, %s208
        %s210 = smul.addr %s209, 8
        %s211 = scalar_lea.vmem %s0, %s210
        %p212 = pneg %p53
        %p213 = pneg %p50
        %p214 = pneg %p74
        %p215 = pneg %p71
        %p216 = pneg %p95
        %p217 = pneg %p92
        %s218 = smul.u32 16, %s23
        %p219 = scmp.lt.s32.totalorder %s218, 15
        %s220 = scalar_select %p219, %s218, 15
        %s221 = smul.addr %s220, 8
        %s222 = scalar_lea.vmem %s3, %s221
        %p223 = pneg %p121
        %p224 = pneg %p118
        %p225 = pneg %p149
        %p226 = pneg %p146
        %s227 = sand.u32 %s136, 1
        %s228 = scalar_lea.sflag [#allocation3], %s227
        %s229 = sand.u32 %s136, 1
        %s230 = smul.addr %s229, 128
        %s231 = scalar_lea.vmem [#allocation2], %s230
        %s232 = smul.u32 16, %s23
        %p233 = scmp.lt.s32.totalorder %s22, 1
        %s234 = scalar_select %p233, %s22, 1
        %p235 = scmp.lt.s32.totalorder %s232, 15
        %s236 = scalar_select %p235, %s232, 15
        %s237 = smul.addr %s234, 16
        %s238 = sadd.s32 %s236, %s237
        %s239 = smul.addr %s238, 8
        %s240 = scalar_lea.vmem %s0, %s239
        %s241 = smul.u32 16, %s23
        %s242 = smul.u32 16, %s23
        %p243 = scmp.lt.s32.totalorder %s242, 15
        %s244 = scalar_select %p243, %s242, 15
        %s245 = smul.addr %s244, 8
        %s246 = scalar_lea.vmem %s3, %s245
        %s247 = smul.u32 16, %s23
        %s248 = smul.u32 16, %s23
        %v249 = vld [vmem:[%s240] sm:$0xff]
        %v250 = vld [vmem:[%s240 + $0x8] sm:$0xff]
        %v251 = vld [vmem:[%s240 + $0x10] sm:$0xff]
        %v252 = vld [vmem:[%s240 + $0x18] sm:$0xff]
        %v253 = vld [vmem:[%s240 + $0x20] sm:$0xff]
        %v254 = vld [vmem:[%s240 + $0x28] sm:$0xff]
        %v255 = vld [vmem:[%s240 + $0x30] sm:$0xff]
        %v256 = vld [vmem:[%s240 + $0x38] sm:$0xff]
        %v257 = vld [vmem:[%s240 + $0x40] sm:$0xff]
        %v258 = vld [vmem:[%s240 + $0x48] sm:$0xff]
        %v259 = vld [vmem:[%s240 + $0x50] sm:$0xff]
        %v260 = vld [vmem:[%s240 + $0x58] sm:$0xff]
        %v261 = vld [vmem:[%s240 + $0x60] sm:$0xff]
        %v262 = vld [vmem:[%s240 + $0x68] sm:$0xff]
        %v263 = vld [vmem:[%s240 + $0x70] sm:$0xff]
        %v264 = vld [vmem:[%s240 + $0x78] sm:$0xff]
        %v265 = vld [vmem:[%s1] sm:$0xff]
        %v266 = vld [vmem:[%s1 + $0x8] sm:$0xff]
        %v267 = vld [vmem:[%s1 + $0x10] sm:$0xff]
        %v268 = vld [vmem:[%s1 + $0x18] sm:$0xff]
        %v269 = vld [vmem:[%s1 + $0x20] sm:$0xff]
        %v270 = vld [vmem:[%s1 + $0x28] sm:$0xff]
        %v271 = vld [vmem:[%s1 + $0x30] sm:$0xff]
        %v272 = vld [vmem:[%s1 + $0x38] sm:$0xff]
        %v273 = vld [vmem:[%s2] sm:$0x3]
        %v275 = vlaneseq
        %v276 = vshrl.u32 %v275, 7
        %v277 = vsub.s32 0, %v276
        %v278 = vrot.slane %v273, %v277
        %v279 = vlaneseq
        %v280 = vshrl.u32 %v279, 7
        %v281 = vsub.s32 1, %v280
        %v282 = vrot.slane %v273, %v281
        %vm285 = vcmask 261120
        %v287 = vsel %vm285, %v249, 0
        %v290 = vsel %vm285, %v250, 0
        %v293 = vsel %vm285, %v251, 0
        %v296 = vsel %vm285, %v252, 0
        %v299 = vsel %vm285, %v253, 0
        %v302 = vsel %vm285, %v254, 0
        %v305 = vsel %vm285, %v255, 0
        %v308 = vsel %vm285, %v256, 0
        %v311 = vsel %vm285, %v257, 0
        %v314 = vsel %vm285, %v258, 0
        %v317 = vsel %vm285, %v259, 0
        %v320 = vsel %vm285, %v260, 0
        %v323 = vsel %vm285, %v261, 0
        %v326 = vsel %vm285, %v262, 0
        %v329 = vsel %vm285, %v263, 0
        %v332 = vsel %vm285, %v264, 0
        %334 = vmatprep.subr.mxu0 0.0
        %335 = vmatpush1.msra.mxu0 0.0
        %336 = vmatprep.subr.mxu0 0.0
        %337 = vmatpush1.msra.mxu0 0.0
        %338 = vmatprep.subr.mxu0 0.0
        %339 = vmatpush1.msra.mxu0 0.0
        %340 = vmatprep.subr.mxu0 0.0
        %341 = vmatpush1.msra.mxu0 0.0
        %342 = vmatprep.subr.mxu0 0.0
        %343 = vmatpush1.msra.mxu0 0.0
        %344 = vmatprep.subr.mxu0 0.0
        %345 = vmatpush1.msra.mxu0 0.0
        %346 = vmatprep.subr.mxu0 0.0
        %347 = vmatpush1.msra.mxu0 0.0
        %348 = vmatprep.subr.mxu0 0.0
        %349 = vmatpush1.msra.mxu0 0.0
        %350 = vmatprep.subr.mxu0 0.0
        %351 = vmatpush1.msra.mxu0 0.0
        %352 = vmatprep.subr.mxu0 0.0
        %353 = vmatpush1.msra.mxu0 0.0
        %354 = vmatprep.subr.mxu0 0.0
        %355 = vmatpush1.msra.mxu0 0.0
        %356 = vmatprep.subr.mxu0 0.0
        %357 = vmatpush1.msra.mxu0 0.0
        %358 = vmatprep.subr.mxu0 %v272
        %359 = vmatpush1.msra.mxu0 %v271
        %360 = vmatprep.subr.mxu0 %v270
        %361 = vmatpush1.msra.mxu0 %v269
        %362 = vmatprep.subr.mxu0 %v268
        %363 = vmatpush1.msra.mxu0 %v267
        %364 = vmatprep.subr.mxu0 %v266
        %365 = vmatpush1.msra.mxu0 %v265
        %366 = vmatprep.subr.mxu0 0.0
        %367 = vmatpush2.msra.mxu0 0.0
        %368 = vmatprep.subr.mxu0 0.0
        %369 = vmatpush2.msra.mxu0 0.0
        %370 = vmatprep.subr.mxu0 0.0
        %371 = vmatpush2.msra.mxu0 0.0
        %372 = vmatprep.subr.mxu0 0.0
        %373 = vmatpush2.msra.mxu0 0.0
        %374 = vmatprep.subr.mxu0 0.0
        %375 = vmatpush2.msra.mxu0 0.0
        %376 = vmatprep.subr.mxu0 0.0
        %377 = vmatpush2.msra.mxu0 0.0
        %378 = vmatprep.subr.mxu0 0.0
        %379 = vmatpush2.msra.mxu0 0.0
        %380 = vmatprep.subr.mxu0 0.0
        %381 = vmatpush2.msra.mxu0 0.0
        %382 = vmatprep.subr.mxu0 0.0
        %383 = vmatpush2.msra.mxu0 0.0
        %384 = vmatprep.subr.mxu0 0.0
        %385 = vmatpush2.msra.mxu0 0.0
        %386 = vmatprep.subr.mxu0 0.0
        %387 = vmatpush2.msra.mxu0 0.0
        %388 = vmatprep.subr.mxu0 0.0
        %389 = vmatpush2.msra.mxu0 0.0
        %390 = vmatprep.subr.mxu0 0.0
        %391 = vmatpush2.msra.mxu0 0.0
        %392 = vmatprep.subr.mxu0 0.0
        %393 = vmatpush2.msra.mxu0 0.0
        %394 = vmatprep.subr.mxu0 0.0
        %395 = vmatpush2.msra.mxu0 0.0
        %396 = vmatprep.subr.mxu0 0.0
        %397 = vmatpush2.msra.mxu0 0.0
        %398 = vmatprep.mubr.f32.mxu0 0.0
        %399 = vmatmul.mubr.f32.gmra.mxu0 %v287
        %v400 = vpop.f32.mrf.mxu0
        %v401 = vadd.f32 %v278, %v400
        %v402 = vpop.f32.mrf.mxu0
        %v403 = vadd.f32 %v282, %v402
        %404 = vmatprep.mubr.f32.mxu0 0.0
        %405 = vmatmul.mubr.f32.gmra.mxu0 %v290
        %v406 = vpop.f32.mrf.mxu0
        %v407 = vadd.f32 %v278, %v406
        %v408 = vpop.f32.mrf.mxu0
        %v409 = vadd.f32 %v282, %v408
        %410 = vmatprep.mubr.f32.mxu0 0.0
        %411 = vmatmul.mubr.f32.gmra.mxu0 %v293
        %v412 = vpop.f32.mrf.mxu0
        %v413 = vadd.f32 %v278, %v412
        %v414 = vpop.f32.mrf.mxu0
        %v415 = vadd.f32 %v282, %v414
        %416 = vmatprep.mubr.f32.mxu0 0.0
        %417 = vmatmul.mubr.f32.gmra.mxu0 %v296
        %v418 = vpop.f32.mrf.mxu0
        %v419 = vadd.f32 %v278, %v418
        %v420 = vpop.f32.mrf.mxu0
        %v421 = vadd.f32 %v282, %v420
        %422 = vmatprep.mubr.f32.mxu0 0.0
        %423 = vmatmul.mubr.f32.gmra.mxu0 %v299
        %v424 = vpop.f32.mrf.mxu0
        %v425 = vadd.f32 %v278, %v424
        %v426 = vpop.f32.mrf.mxu0
        %v427 = vadd.f32 %v282, %v426
        %428 = vmatprep.mubr.f32.mxu0 0.0
        %429 = vmatmul.mubr.f32.gmra.mxu0 %v302
        %v430 = vpop.f32.mrf.mxu0
        %v431 = vadd.f32 %v278, %v430
        %v432 = vpop.f32.mrf.mxu0
        %v433 = vadd.f32 %v282, %v432
        %434 = vmatprep.mubr.f32.mxu0 0.0
        %435 = vmatmul.mubr.f32.gmra.mxu0 %v305
        %v436 = vpop.f32.mrf.mxu0
        %v437 = vadd.f32 %v278, %v436
        %v438 = vpop.f32.mrf.mxu0
        %v439 = vadd.f32 %v282, %v438
        %440 = vmatprep.mubr.f32.mxu0 0.0
        %441 = vmatmul.mubr.f32.gmra.mxu0 %v308
        %v442 = vpop.f32.mrf.mxu0
        %v443 = vadd.f32 %v278, %v442
        %v444 = vpop.f32.mrf.mxu0
        %v445 = vadd.f32 %v282, %v444
        %446 = vmatprep.mubr.f32.mxu0 0.0
        %447 = vmatmul.mubr.f32.gmra.mxu0 %v311
        %v448 = vpop.f32.mrf.mxu0
        %v449 = vadd.f32 %v278, %v448
        %v450 = vpop.f32.mrf.mxu0
        %v451 = vadd.f32 %v282, %v450
        %452 = vmatprep.mubr.f32.mxu0 0.0
        %453 = vmatmul.mubr.f32.gmra.mxu0 %v314
        %v454 = vpop.f32.mrf.mxu0
        %v455 = vadd.f32 %v278, %v454
        %v456 = vpop.f32.mrf.mxu0
        %v457 = vadd.f32 %v282, %v456
        %458 = vmatprep.mubr.f32.mxu0 0.0
        %459 = vmatmul.mubr.f32.gmra.mxu0 %v317
        %v460 = vpop.f32.mrf.mxu0
        %v461 = vadd.f32 %v278, %v460
        %v462 = vpop.f32.mrf.mxu0
        %v463 = vadd.f32 %v282, %v462
        %464 = vmatprep.mubr.f32.mxu0 0.0
        %465 = vmatmul.mubr.f32.gmra.mxu0 %v320
        %v466 = vpop.f32.mrf.mxu0
        %v467 = vadd.f32 %v278, %v466
        %v468 = vpop.f32.mrf.mxu0
        %v469 = vadd.f32 %v282, %v468
        %470 = vmatprep.mubr.f32.mxu0 0.0
        %471 = vmatmul.mubr.f32.gmra.mxu0 %v323
        %v472 = vpop.f32.mrf.mxu0
        %v473 = vadd.f32 %v278, %v472
        %v474 = vpop.f32.mrf.mxu0
        %v475 = vadd.f32 %v282, %v474
        %476 = vmatprep.mubr.f32.mxu0 0.0
        %477 = vmatmul.mubr.f32.gmra.mxu0 %v326
        %v478 = vpop.f32.mrf.mxu0
        %v479 = vadd.f32 %v278, %v478
        %v480 = vpop.f32.mrf.mxu0
        %v481 = vadd.f32 %v282, %v480
        %482 = vmatprep.mubr.f32.mxu0 0.0
        %483 = vmatmul.mubr.f32.gmra.mxu0 %v329
        %v484 = vpop.f32.mrf.mxu0
        %v485 = vadd.f32 %v278, %v484
        %v486 = vpop.f32.mrf.mxu0
        %v487 = vadd.f32 %v282, %v486
        %488 = vmatprep.mubr.f32.mxu0 0.0
        %489 = vmatmul.mubr.f32.gmra.mxu0 %v332
        %v490 = vpop.f32.mrf.mxu0
        %v491 = vadd.f32 %v278, %v490
        %v492 = vpop.f32.mrf.mxu0
        %v493 = vadd.f32 %v282, %v492
        %494 = vdwg.mxu0
        %v495 = vld [vmem:[%s246] sm:$0xff]
        %v496 = vld [vmem:[%s246 + $0x8] sm:$0xff]
        %v497 = vld [vmem:[%s246 + $0x10] sm:$0xff]
        %v498 = vld [vmem:[%s246 + $0x18] sm:$0xff]
        %v499 = vld [vmem:[%s246 + $0x20] sm:$0xff]
        %v500 = vld [vmem:[%s246 + $0x28] sm:$0xff]
        %v501 = vld [vmem:[%s246 + $0x30] sm:$0xff]
        %v502 = vld [vmem:[%s246 + $0x38] sm:$0xff]
        %v503 = vld [vmem:[%s246 + $0x40] sm:$0xff]
        %v504 = vld [vmem:[%s246 + $0x48] sm:$0xff]
        %v505 = vld [vmem:[%s246 + $0x50] sm:$0xff]
        %v506 = vld [vmem:[%s246 + $0x58] sm:$0xff]
        %v507 = vld [vmem:[%s246 + $0x60] sm:$0xff]
        %v508 = vld [vmem:[%s246 + $0x68] sm:$0xff]
        %v509 = vld [vmem:[%s246 + $0x70] sm:$0xff]
        %v510 = vld [vmem:[%s246 + $0x78] sm:$0xff]
        %v511 = vmul.f32 %v401, %v495
        %v512 = vmul.f32 %v407, %v496
        %v513 = vmul.f32 %v413, %v497
        %v514 = vmul.f32 %v419, %v498
        %v515 = vmul.f32 %v425, %v499
        %v516 = vmul.f32 %v431, %v500
        %v517 = vmul.f32 %v437, %v501
        %v518 = vmul.f32 %v443, %v502
        %v519 = vmul.f32 %v449, %v503
        %v520 = vmul.f32 %v455, %v504
        %v521 = vmul.f32 %v461, %v505
        %v522 = vmul.f32 %v467, %v506
        %v523 = vmul.f32 %v473, %v507
        %v524 = vmul.f32 %v479, %v508
        %v525 = vmul.f32 %v485, %v509
        %v526 = vmul.f32 %v491, %v510
        %s527 = scalar_lea.vmem %s246, 128
        %v528 = vld [vmem:[%s527] sm:$0xff]
        %v529 = vld [vmem:[%s527 + $0x8] sm:$0xff]
        %v530 = vld [vmem:[%s527 + $0x10] sm:$0xff]
        %v531 = vld [vmem:[%s527 + $0x18] sm:$0xff]
        %v532 = vld [vmem:[%s527 + $0x20] sm:$0xff]
        %v533 = vld [vmem:[%s527 + $0x28] sm:$0xff]
        %v534 = vld [vmem:[%s527 + $0x30] sm:$0xff]
        %v535 = vld [vmem:[%s527 + $0x38] sm:$0xff]
        %v536 = vld [vmem:[%s527 + $0x40] sm:$0xff]
        %v537 = vld [vmem:[%s527 + $0x48] sm:$0xff]
        %v538 = vld [vmem:[%s527 + $0x50] sm:$0xff]
        %v539 = vld [vmem:[%s527 + $0x58] sm:$0xff]
        %v540 = vld [vmem:[%s527 + $0x60] sm:$0xff]
        %v541 = vld [vmem:[%s527 + $0x68] sm:$0xff]
        %v542 = vld [vmem:[%s527 + $0x70] sm:$0xff]
        %v543 = vld [vmem:[%s527 + $0x78] sm:$0xff]
        %v544 = vmul.f32 %v403, %v528
        %v545 = vmul.f32 %v409, %v529
        %v546 = vmul.f32 %v415, %v530
        %v547 = vmul.f32 %v421, %v531
        %v548 = vmul.f32 %v427, %v532
        %v549 = vmul.f32 %v433, %v533
        %v550 = vmul.f32 %v439, %v534
        %v551 = vmul.f32 %v445, %v535
        %v552 = vmul.f32 %v451, %v536
        %v553 = vmul.f32 %v457, %v537
        %v554 = vmul.f32 %v463, %v538
        %v555 = vmul.f32 %v469, %v539
        %v556 = vmul.f32 %v475, %v540
        %v557 = vmul.f32 %v481, %v541
        %v558 = vmul.f32 %v487, %v542
        %v559 = vmul.f32 %v493, %v543
        %v560 = vadd.f32 %v511, %v544
        %v561 = vadd.f32 %v512, %v545
        %v562 = vadd.f32 %v513, %v546
        %v563 = vadd.f32 %v514, %v547
        %v564 = vadd.f32 %v515, %v548
        %v565 = vadd.f32 %v516, %v549
        %v566 = vadd.f32 %v517, %v550
        %v567 = vadd.f32 %v518, %v551
        %v568 = vadd.f32 %v519, %v552
        %v569 = vadd.f32 %v520, %v553
        %v570 = vadd.f32 %v521, %v554
        %v571 = vadd.f32 %v522, %v555
        %v572 = vadd.f32 %v523, %v556
        %v573 = vadd.f32 %v524, %v557
        %v574 = vadd.f32 %v525, %v558
        %v575 = vadd.f32 %v526, %v559
        %576 = vst [vmem:[%s231] sm:$0xff] %v560
        %577 = vst [vmem:[%s231 + $0x8] sm:$0xff] %v561
        %578 = vst [vmem:[%s231 + $0x10] sm:$0xff] %v562
        %579 = vst [vmem:[%s231 + $0x18] sm:$0xff] %v563
        %580 = vst [vmem:[%s231 + $0x20] sm:$0xff] %v564
        %581 = vst [vmem:[%s231 + $0x28] sm:$0xff] %v565
        %582 = vst [vmem:[%s231 + $0x30] sm:$0xff] %v566
        %583 = vst [vmem:[%s231 + $0x38] sm:$0xff] %v567
        %584 = vst [vmem:[%s231 + $0x40] sm:$0xff] %v568
        %585 = vst [vmem:[%s231 + $0x48] sm:$0xff] %v569
        %586 = vst [vmem:[%s231 + $0x50] sm:$0xff] %v570
        %587 = vst [vmem:[%s231 + $0x58] sm:$0xff] %v571
        %588 = vst [vmem:[%s231 + $0x60] sm:$0xff] %v572
        %589 = vst [vmem:[%s231 + $0x68] sm:$0xff] %v573
        %590 = vst [vmem:[%s231 + $0x70] sm:$0xff] %v574
        %591 = vst [vmem:[%s231 + $0x78] sm:$0xff] %v575
        %s592 = sand.u32 %s136, 1
        %s593 = scalar_lea.sflag [#allocation3], %s592
        %s594 = sand.u32 %s136, 1
        %s595 = smul.addr %s594, 128
        %s596 = scalar_lea.vmem [#allocation2], %s595
        // Predicated region
        $region37: #{tpu_custom_call.1} parent=35 // pred_check
          %p597 = pneg %p146
        $region38: #{tpu_custom_call.1} parent=35 // pred_check_branch
          %599 = sbr.rel (%p597) target = $region40
        $region39: #{tpu_custom_call.1} parent=35 // pred_region
          %s600 = smul.u32 16, %s23
          %s602 = ssub.s32 2048, 2048
          %603 = vsyncadd %s593, %s602
          %s604 = smul.addr %s22, 16
          %s605 = sadd.s32 %s600, %s604
          %s606 = smul.addr %s605, 128
          %s607 = scalar_lea.hbm %s4, %s606
          %s608 = sshll.u32 %s596, 4
          %s609 = int_to_ptr.vmem [resolvable:$true] %s608
          %614 = dma.vmem_to_hbm [thread:$0]  %s609, 2048, %s607, %s593, 128, 128, 8
        $region40: #{tpu_custom_call.1} parent=35 // pred_fallthru
          _
      $region36: #{tpu_custom_call.1} parent=5 // pred_fallthru
        _
      %p615 = scmp.le.s32.totalorder 2, %s13
      // Predicated region
      $region41: #{tpu_custom_call.1} parent=5 // pred_check
        %p616 = pneg %p615
      $region42: #{tpu_custom_call.1} parent=5 // pred_check_branch
        %618 = sbr.rel (%p616) target = $region44
      $region43: #{tpu_custom_call.1} parent=5 // pred_region
        %s619 = ssub.s32 %s13, 2
        // Predicated region
        $region45: #{tpu_custom_call.1} parent=43 // pred_check
          %p620 = pneg %p152
        $region46: #{tpu_custom_call.1} parent=43 // pred_check_branch
          %622 = sbr.rel (%p620) target = $region48
        $region47: #{tpu_custom_call.1} parent=43 // pred_region
          %s623 = sand.u32 %s137, 1
          %s624 = scalar_lea.sflag [#allocation3], %s623
          %s625 = sand.u32 %s137, 1
          %s626 = smul.addr %s625, 128
          %s627 = scalar_lea.vmem [#allocation2], %s626
          %628 = dma.done %s624, 2048
        $region48: #{tpu_custom_call.1} parent=43 // pred_fallthru
          _
      $region44: #{tpu_custom_call.1} parent=5 // pred_fallthru
        _
    $region6: #{tpu_custom_call.1} parent=1 // loop_footer
      %s17 = sadd.s32 1, %s13
    $region7: #{tpu_custom_call.1} parent=1 // loop_footer_branch
      %12 = sbr.rel target = $region3
    $region8: #{tpu_custom_call.1} parent=1 // loop_exit
      _
    %629 = vsyncpa [#allocation3], 1
    %s630 = scalar_lea.sflag [#allocation3], 1
    %631 = vsyncpa %s630, 1

</llo_original>
